<compile_context>
chip_gen: v5e
topology: v5e:2x2
jax: 0.10.0
libtpu: 0.0.40
codegen_flags: <defaults>
</compile_context>

<pallas_src>
import math
from functools import partial

import jax
import jax.numpy as jnp
from jax.experimental import pallas as pl
from jax.experimental.pallas import tpu as pltpu


_INV_SQRT2 = 0.7071067811865476


def _round_up(n, m):
    return ((n + m - 1) // m) * m


def _mlp_kernel(x_ref, w1_ref, b1_ref, w2_ref, b2_ref, o_ref, acc_ref):
    # x_ref  : (tm, inp_dim)        VMEM
    # w1_ref : (inp_dim, tn)        VMEM (hidden-dim tile)
    # b1_ref : (1, tn)      f32
    # w2_ref : (tn, out_pad)        VMEM (hidden-dim tile)
    # b2_ref : (1, out_pad) f32
    # o_ref  : (tm, out_pad)
    # acc_ref: (tm, out_pad) f32 accumulator across the hidden-dim grid axis.
    j = pl.program_id(1)

    @pl.when(j == 0)
    def _():
        acc_ref[...] = jnp.zeros_like(acc_ref)

    # First matmul (MXU), f32 accumulation, bias add in f32.
    h = jnp.dot(x_ref[...], w1_ref[...], preferred_element_type=jnp.float32)
    h = h + b1_ref[...]
    # Exact GELU (matches torch.nn.functional.gelu default, erf formulation).
    h = 0.5 * h * (1.0 + jax.lax.erf(h * _INV_SQRT2))

    # Second matmul: partial contribution of this hidden-dim tile.
    acc_ref[...] += jnp.dot(
        h.astype(w2_ref.dtype), w2_ref[...], preferred_element_type=jnp.float32
    )

    @pl.when(j == pl.num_programs(1) - 1)
    def _():
        o_ref[...] = (acc_ref[...] + b2_ref[...]).astype(o_ref.dtype)


def mlp_block(x, w1, b1, w2, b2, *, tile_m=256, tile_n=512, compute_dtype=None):
    """Fused MLP block. x: [..., inp_dim] -> [..., out_dim].

    compute_dtype: optional dtype (e.g. jnp.bfloat16) for the matmul inputs;
    accumulation is always f32. None keeps the input/weight dtypes unchanged.
    """
    orig_dtype = x.dtype
    inp_dim = x.shape[-1]
    mlp_dim = w1.shape[1]
    out_dim = w2.shape[1]
    lead_shape = x.shape[:-1]
    M = math.prod(lead_shape) if lead_shape else 1

    b1 = jnp.asarray(b1).reshape(1, mlp_dim).astype(jnp.float32)
    b2 = jnp.asarray(b2).reshape(1, out_dim).astype(jnp.float32)
    if compute_dtype is not None:
        x = x.astype(compute_dtype)
        w1 = w1.astype(compute_dtype)
        w2 = w2.astype(compute_dtype)

    x2d = x.reshape(M, inp_dim)

    # Row tile: big (feeds the MXU), aligned to 32 sublanes (safe for f32/bf16),
    # never larger than needed for the (padded) row count.
    tm = min(max(32, _round_up(tile_m, 32)), _round_up(M, 32))
    tm = _round_up(tm, 32)
    m_pad = _round_up(M, tm)

    # Hidden-dim tile: multiple of 128 lanes; mlp_dim padded to a multiple of tn.
    tn = min(max(128, _round_up(tile_n, 128)), _round_up(mlp_dim, 128))
    tn = _round_up(tn, 128)
    n_pad = _round_up(mlp_dim, tn)

    # Lane-dense output: pad out_dim to a multiple of 128.
    out_pad = _round_up(out_dim, 128)

    if m_pad != M:
        x2d = jnp.pad(x2d, ((0, m_pad - M), (0, 0)))
    if n_pad != mlp_dim:
        w1 = jnp.pad(w1, ((0, 0), (0, n_pad - mlp_dim)))
        b1 = jnp.pad(b1, ((0, 0), (0, n_pad - mlp_dim)))
        w2 = jnp.pad(w2, ((0, n_pad - mlp_dim), (0, 0)))
    if out_pad != out_dim:
        w2 = jnp.pad(w2, ((0, 0), (0, out_pad - out_dim)))
        b2 = jnp.pad(b2, ((0, 0), (0, out_pad - out_dim)))

    grid = (m_pad // tm, n_pad // tn)  # reduction (hidden) axis last

    isz = jnp.dtype(x2d.dtype).itemsize
    wsz = jnp.dtype(w1.dtype).itemsize
    osz = jnp.dtype(orig_dtype).itemsize

    # VMEM footprint estimate (double-buffered I/O + f32 accumulator + GELU tmp).
    vmem_est = (
        2 * tm * inp_dim * isz
        + 2 * inp_dim * tn * wsz
        + 2 * tn * 4
        + 2 * tn * out_pad * wsz
        + 2 * out_pad * 4
        + 2 * tm * out_pad * osz
        + tm * out_pad * 4
        + tm * tn * 4
    )
    vmem_limit = int(min(64 * 2**20, max(16 * 2**20, vmem_est + vmem_est // 2 + 2 * 2**20)))

    cost = pl.CostEstimate(
        flops=2 * M * (inp_dim * mlp_dim + mlp_dim * out_dim),
        transcendentals=M * mlp_dim,
        bytes_accessed=(
            x2d.size * isz
            + w1.size * wsz
            + w2.size * wsz
            + (b1.size + b2.size) * 4
            + m_pad * out_pad * osz
        ),
    )

    out2d = pl.pallas_call(
        _mlp_kernel,
        out_shape=jax.ShapeDtypeStruct((m_pad, out_pad), orig_dtype),
        grid_spec=pltpu.PrefetchScalarGridSpec(
            num_scalar_prefetch=0,
            grid=grid,
            in_specs=[
                pl.BlockSpec((tm, inp_dim), lambda i, j: (i, 0)),
                pl.BlockSpec((inp_dim, tn), lambda i, j: (0, j)),
                pl.BlockSpec((1, tn), lambda i, j: (0, j)),
                pl.BlockSpec((tn, out_pad), lambda i, j: (j, 0)),
                pl.BlockSpec((1, out_pad), lambda i, j: (0, 0)),
            ],
            out_specs=pl.BlockSpec((tm, out_pad), lambda i, j: (i, 0)),
            scratch_shapes=[pltpu.VMEM((tm, out_pad), jnp.float32)],
        ),
        compiler_params=pltpu.CompilerParams(
            dimension_semantics=("parallel", "arbitrary"),
            vmem_limit_bytes=vmem_limit,
        ),
        cost_estimate=cost,
    )(x2d, w1, b1, w2, b2)

    return out2d[:M, :out_dim].reshape(*lead_shape, out_dim)


def init_params(key, inp_dim, mlp_dim, out_dim=None, dtype=jnp.float32):
    """Deterministic synthetic parameter init (shapes from MlpBlockPt.__init__)."""
    out_dim = inp_dim if out_dim is None else out_dim
    k1, k2, k3, k4 = jax.random.split(key, 4)
    w1 = jax.random.normal(k1, (inp_dim, mlp_dim), dtype) * 0.02
    b1 = jax.random.normal(k2, (1, mlp_dim), dtype) * 0.02
    w2 = jax.random.normal(k3, (mlp_dim, out_dim), dtype) * 0.02
    b2 = jax.random.normal(k4, (1, out_dim), dtype) * 0.02
    return w1, b1, w2, b2


def mlp_block_ref(x, w1, b1, w2, b2):
    """Pure-JAX reference of the deterministic forward pass."""
    h = x @ w1 + b1[0]
    h = 0.5 * h * (1.0 + jax.lax.erf(h / jnp.sqrt(2.0)))
    return h @ w2 + b2[0]


if __name__ == "__main__":
    # Small shapes consistent with the module: (batch, seq, inp_dim)
    batch, seq, inp_dim, mlp_dim = 2, 8, 32, 128
    key = jax.random.PRNGKey(0)
    kx, kp = jax.random.split(key)

    x = jax.random.normal(kx, (batch, seq, inp_dim), jnp.float32)
    w1, b1, w2, b2 = init_params(kp, inp_dim, mlp_dim)
    ref = mlp_block_ref(x, w1, b1, w2, b2)

    # Default path (keeps input/weight dtypes): exact match vs. reference.
    out = mlp_block(x, w1, b1, w2, b2)
    out = jax.block_until_ready(out)
    assert out.shape == (batch, seq, inp_dim), out.shape
    assert jnp.allclose(out, ref, atol=1e-5, rtol=1e-5), "mismatch vs reference (f32)"

    # bf16 MXU path (f32 accumulation): looser tolerance.
    out_bf16 = mlp_block(x, w1, b1, w2, b2, compute_dtype=jnp.bfloat16)
    out_bf16 = jax.block_until_ready(out_bf16)
    assert out_bf16.shape == (batch, seq, inp_dim), out_bf16.shape
    assert jnp.allclose(out_bf16, ref, atol=5e-2, rtol=5e-2), "mismatch vs reference (bf16)"

    print("KERNEL_OK")
</pallas_src>

<mosaic_0001>
module attributes {stable_mosaic.version = 11 : i64} {
  func.func @_mlp_kernel(%arg0: i32, %arg1: i32, %arg2: memref<32x32xf32, #tpu.memory_space<vmem>>, %arg3: memref<32x128xf32, #tpu.memory_space<vmem>>, %arg4: memref<1x128xf32, #tpu.memory_space<vmem>>, %arg5: memref<128x128xf32, #tpu.memory_space<vmem>>, %arg6: memref<1x128xf32, #tpu.memory_space<vmem>>, %arg7: memref<32x128xf32, #tpu.memory_space<vmem>>, %arg8: memref<32x128xf32, #tpu.memory_space<vmem>>) attributes {dimension_semantics = [#tpu.dimension_semantics<parallel>, #tpu.dimension_semantics<arbitrary>], iteration_bounds = array<i64: 1, 1>, scalar_prefetch = 0 : i64, scratch_operands = 1 : i64, tpu.core_type = #tpu.core_type<tc>, window_params = [{transform_indices = @transform_0, window_bounds = array<i64: 32, 32>}, {transform_indices = @transform_1, window_bounds = array<i64: 32, 128>}, {transform_indices = @transform_2, window_bounds = array<i64: 1, 128>}, {transform_indices = @transform_3, window_bounds = array<i64: 128, 128>}, {pipeline_mode = #tpu.pipeline_mode<synchronous>, transform_indices = @transform_4, window_bounds = array<i64: 1, 128>}, {transform_indices = @transform_5, window_bounds = array<i64: 32, 128>}]} {
    %c0_i32 = arith.constant 0 : i32
    %0 = arith.cmpi eq, %arg1, %c0_i32 : i32
    %1 = arith.extui %0 : i1 to i32
    %c0_i32_0 = arith.constant 0 : i32
    %2 = arith.cmpi ne, %1, %c0_i32_0 : i32
    scf.if %2 {
      %cst_18 = arith.constant 0.000000e+00 : f32
      %25 = vector.broadcast %cst_18 : f32 to vector<32x128xf32>
      %c0_19 = arith.constant 0 : index
      %c0_20 = arith.constant 0 : index
      %26 = vector.load %arg8[%c0_19, %c0_20] : memref<32x128xf32, #tpu.memory_space<vmem>>, vector<32x128xf32>
      tpu.vector_store %arg8[%c0_19, %c0_20], %25 {strides = array<i32>} : memref<32x128xf32, #tpu.memory_space<vmem>>, vector<32x128xf32>,
    } else {
    }
    %c0 = arith.constant 0 : index
    %c0_1 = arith.constant 0 : index
    %3 = vector.load %arg2[%c0, %c0_1] : memref<32x32xf32, #tpu.memory_space<vmem>>, vector<32x32xf32>
    %c0_2 = arith.constant 0 : index
    %c0_3 = arith.constant 0 : index
    %4 = vector.load %arg3[%c0_2, %c0_3] : memref<32x128xf32, #tpu.memory_space<vmem>>, vector<32x128xf32>
    %cst = arith.constant dense<0.000000e+00> : vector<32x128xf32>
    %5 = tpu.matmul %3, %4, %cst {dimension_numbers = #tpu.dot_dimension_numbers<[1], [0], [0], [1], [0, 0, 1, 1], [], []>} : vector<32x32xf32>, vector<32x128xf32>, vector<32x128xf32> -> vector<32x128xf32>
    %c0_4 = arith.constant 0 : index
    %c0_5 = arith.constant 0 : index
    %6 = vector.load %arg4[%c0_4, %c0_5] : memref<1x128xf32, #tpu.memory_space<vmem>>, vector<1x128xf32>
    %7 = vector.broadcast %6 : vector<1x128xf32> to vector<32x128xf32>
    %8 = arith.addf %5, %7 : vector<32x128xf32>
    %cst_6 = arith.constant 5.000000e-01 : f32
    %9 = vector.broadcast %cst_6 : f32 to vector<32x128xf32>
    %10 = arith.mulf %9, %8 : vector<32x128xf32>
    %cst_7 = arith.constant 0.707106769 : f32
    %11 = vector.broadcast %cst_7 : f32 to vector<32x128xf32>
    %12 = arith.mulf %8, %11 : vector<32x128xf32>
    %13 = math.erf %12 : vector<32x128xf32>
    %cst_8 = arith.constant 1.000000e+00 : f32
    %14 = vector.broadcast %cst_8 : f32 to vector<32x128xf32>
    %15 = arith.addf %14, %13 : vector<32x128xf32>
    %16 = arith.mulf %10, %15 : vector<32x128xf32>
    %c0_9 = arith.constant 0 : index
    %c0_10 = arith.constant 0 : index
    %17 = vector.load %arg8[%c0_9, %c0_10] : memref<32x128xf32, #tpu.memory_space<vmem>>, vector<32x128xf32>
    %c0_11 = arith.constant 0 : index
    %c0_12 = arith.constant 0 : index
    %18 = vector.load %arg5[%c0_11, %c0_12] : memref<128x128xf32, #tpu.memory_space<vmem>>, vector<128x128xf32>
    %cst_13 = arith.constant dense<0.000000e+00> : vector<32x128xf32>
    %19 = tpu.matmul %16, %18, %cst_13 {dimension_numbers = #tpu.dot_dimension_numbers<[1], [0], [0], [1], [0, 0, 1, 1], [], []>} : vector<32x128xf32>, vector<128x128xf32>, vector<32x128xf32> -> vector<32x128xf32>
    %20 = arith.addf %17, %19 : vector<32x128xf32>
    %c0_14 = arith.constant 0 : index
    %c0_15 = arith.constant 0 : index
    %21 = vector.load %arg8[%c0_14, %c0_15] : memref<32x128xf32, #tpu.memory_space<vmem>>, vector<32x128xf32>
    tpu.vector_store %arg8[%c0_14, %c0_15], %20 {strides = array<i32>} : memref<32x128xf32, #tpu.memory_space<vmem>>, vector<32x128xf32>,
    %c0_i32_16 = arith.constant 0 : i32
    %22 = arith.cmpi eq, %arg1, %c0_i32_16 : i32
    %23 = arith.extui %22 : i1 to i32
    %c0_i32_17 = arith.constant 0 : i32
    %24 = arith.cmpi ne, %23, %c0_i32_17 : i32
    scf.if %24 {
      %c0_18 = arith.constant 0 : index
      %c0_19 = arith.constant 0 : index
      %25 = vector.load %arg8[%c0_18, %c0_19] : memref<32x128xf32, #tpu.memory_space<vmem>>, vector<32x128xf32>
      %c0_20 = arith.constant 0 : index
      %c0_21 = arith.constant 0 : index
      %26 = vector.load %arg6[%c0_20, %c0_21] : memref<1x128xf32, #tpu.memory_space<vmem>>, vector<1x128xf32>
      %27 = vector.broadcast %26 : vector<1x128xf32> to vector<32x128xf32>
      %28 = arith.addf %25, %27 : vector<32x128xf32>
      %c0_22 = arith.constant 0 : index
      %c0_23 = arith.constant 0 : index
      %29 = vector.load %arg7[%c0_22, %c0_23] : memref<32x128xf32, #tpu.memory_space<vmem>>, vector<32x128xf32>
      tpu.vector_store %arg7[%c0_22, %c0_23], %28 {strides = array<i32>} : memref<32x128xf32, #tpu.memory_space<vmem>>, vector<32x128xf32>,
    } else {
    }
    return
  }
  func.func @transform_0(%arg0: i32, %arg1: i32) -> (i32, i32) {
    %c0_i32 = arith.constant 0 : i32
    %c0_i32_0 = arith.constant 0 : i32
    return %arg0, %c0_i32 : i32, i32
  }
  func.func @transform_1(%arg0: i32, %arg1: i32) -> (i32, i32) {
    %c0_i32 = arith.constant 0 : i32
    %c0_i32_0 = arith.constant 0 : i32
    return %c0_i32, %arg1 : i32, i32
  }
  func.func @transform_2(%arg0: i32, %arg1: i32) -> (i32, i32) {
    %c0_i32 = arith.constant 0 : i32
    %c0_i32_0 = arith.constant 0 : i32
    return %c0_i32, %arg1 : i32, i32
  }
  func.func @transform_3(%arg0: i32, %arg1: i32) -> (i32, i32) {
    %c0_i32 = arith.constant 0 : i32
    %c0_i32_0 = arith.constant 0 : i32
    return %arg1, %c0_i32 : i32, i32
  }
  func.func @transform_4(%arg0: i32, %arg1: i32) -> (i32, i32) {
    %c0_i32 = arith.constant 0 : i32
    %c0_i32_0 = arith.constant 0 : i32
    %c0_i32_1 = arith.constant 0 : i32
    return %c0_i32, %c0_i32_0 : i32, i32
  }
  func.func @transform_5(%arg0: i32, %arg1: i32) -> (i32, i32) {
    %c0_i32 = arith.constant 0 : i32
    %c0_i32_0 = arith.constant 0 : i32
    return %arg0, %c0_i32 : i32, i32
  }
}

</mosaic_0001>

<llo_original>
// kernel: tpu_custom_call.1
$region0: #{tpu_custom_call.1}
  #allocation0 [shape = 'u32[]', space=smem, size = 0x4, offset = 0x4, fixed_abs, tag = 'smem constant byte address 0x4 - core index']
  #allocation1 [shape = 'u32[72,128]{1,0:T(1,128)}', space=vmem, size = 0x9000, scoped, tag = 'internal scratch']
  #allocation2 [shape = 'f32[32,128]{1,0:T(8,128)}', space=vmem, size = 0x4000, scoped, tag = 'scratch operand']
  %s0 = inlined_call_operand.hbm [shape: f32[32,32], index: 0, kind: input, shape index: {}]
  %s1 = inlined_call_operand.hbm [shape: f32[32,128], index: 1, kind: input, shape index: {}]
  %s2 = inlined_call_operand.vmem [shape: f32[1,128], index: 2, kind: input, shape index: {}]
  %s3 = inlined_call_operand.hbm [shape: f32[128,128], index: 3, kind: input, shape index: {}]
  %s4 = inlined_call_operand.vmem [shape: f32[1,128], index: 4, kind: input, shape index: {}]
  %s5 = inlined_call_operand.hbm [shape: f32[32,128], index: 5, kind: output, shape index: {}]
  %s6 = sld [smem:[#allocation0]]
  $region50: #{tpu_custom_call.1} parent=0
    _
  %s8 = ssub.s32 1, %s6
  %s9 = scalar_select 0, %s8, %s6
  $region1: #{tpu_custom_call.1} parent=0
    #allocation3 [shape = 'u8[16384]{0}', space=vmem, size = 0x4000, scoped, tag = 'input window, operand 0, single buffered']
    #allocation4 [shape = 's32[1]{0}', space=sflag, size = 0x4, scoped, tag = 'scoped memory for tpu_custom_call.1']
    #allocation5 [shape = 's32[1]{0}', space=sflag, size = 0x4, scoped, tag = 'scoped memory for tpu_custom_call.1']
    #allocation6 [shape = 'u8[16384]{0}', space=vmem, size = 0x4000, scoped, tag = 'input window, operand 1, single buffered']
    #allocation7 [shape = 's32[1]{0}', space=sflag, size = 0x4, scoped, tag = 'scoped memory for tpu_custom_call.1']
    #allocation8 [shape = 'u8[65536]{0}', space=vmem, size = 0x10000, scoped, tag = 'input window, operand 3, single buffered']
    #allocation9 [shape = 'u8[16384]{0}', space=vmem, size = 0x4000, scoped, tag = 'output window, operand 0, single buffered']
    %10 = vsyncpa [#allocation4], 0
    %11 = vsyncpa [#allocation7], 0
    %12 = vsyncpa [#allocation5], 0
    // Predicated region
    $region2: #{tpu_custom_call.1} parent=1 // pred_check
      _
    $region3: #{tpu_custom_call.1} parent=1 // pred_check_branch
      %14 = sbr.rel (0) target = $region5
    $region4: #{tpu_custom_call.1} parent=1 // pred_region
      %16 = vsyncadd [#allocation4], 0
      %s17 = sshll.u32 %s0, 4
      %s18 = int_to_ptr.hbm [resolvable:$true] %s17
      %s19 = sshll.u32 [#allocation3], 4
      %s20 = int_to_ptr.vmem [resolvable:$true] %s19
      %25 = dma.hbm_to_vmem [thread:$0]  %s18, 512, %s20, [#allocation4], 128, 128, 8
    $region5: #{tpu_custom_call.1} parent=1 // pred_fallthru
      _
    // Predicated region
    $region6: #{tpu_custom_call.1} parent=1 // pred_check
      _
    $region7: #{tpu_custom_call.1} parent=1 // pred_check_branch
      %27 = sbr.rel (0) target = $region9
    $region8: #{tpu_custom_call.1} parent=1 // pred_region
      %29 = vsyncadd [#allocation7], 0
      %s30 = sshll.u32 %s1, 4
      %s31 = int_to_ptr.hbm [resolvable:$true] %s30
      %s32 = sshll.u32 [#allocation6], 4
      %s33 = int_to_ptr.vmem [resolvable:$true] %s32
      %38 = dma.hbm_to_vmem [thread:$0]  %s31, 512, %s33, [#allocation7], 128, 128, 8
    $region9: #{tpu_custom_call.1} parent=1 // pred_fallthru
      _
    // Predicated region
    $region10: #{tpu_custom_call.1} parent=1 // pred_check
      _
    $region11: #{tpu_custom_call.1} parent=1 // pred_check_branch
      %40 = sbr.rel (0) target = $region13
    $region12: #{tpu_custom_call.1} parent=1 // pred_region
      _
    $region13: #{tpu_custom_call.1} parent=1 // pred_fallthru
      _
    // Predicated region
    $region14: #{tpu_custom_call.1} parent=1 // pred_check
      _
    $region15: #{tpu_custom_call.1} parent=1 // pred_check_branch
      %42 = sbr.rel (0) target = $region17
    $region16: #{tpu_custom_call.1} parent=1 // pred_region
      %44 = vsyncadd [#allocation7], 0
      %s45 = sshll.u32 %s3, 4
      %s46 = int_to_ptr.hbm [resolvable:$true] %s45
      %s47 = sshll.u32 [#allocation8], 4
      %s48 = int_to_ptr.vmem [resolvable:$true] %s47
      %53 = dma.hbm_to_vmem [thread:$0]  %s46, 2048, %s48, [#allocation7], 128, 128, 8
    $region17: #{tpu_custom_call.1} parent=1 // pred_fallthru
      _
    // Predicated region
    $region18: #{tpu_custom_call.1} parent=1 // pred_check
      _
    $region19: #{tpu_custom_call.1} parent=1 // pred_check_branch
      %55 = sbr.rel (0) target = $region21
    $region20: #{tpu_custom_call.1} parent=1 // pred_region
      _
    $region21: #{tpu_custom_call.1} parent=1 // pred_fallthru
      _
    // Predicated region
    $region22: #{tpu_custom_call.1} parent=1 // pred_check
      _
    $region23: #{tpu_custom_call.1} parent=1 // pred_check_branch
      %57 = sbr.rel (0) target = $region25
    $region24: #{tpu_custom_call.1} parent=1 // pred_region
      %59 = dma.done [#allocation4], 512
    $region25: #{tpu_custom_call.1} parent=1 // pred_fallthru
      _
    // Predicated region
    $region26: #{tpu_custom_call.1} parent=1 // pred_check
      _
    $region27: #{tpu_custom_call.1} parent=1 // pred_check_branch
      %61 = sbr.rel (0) target = $region29
    $region28: #{tpu_custom_call.1} parent=1 // pred_region
      %63 = dma.done [#allocation7], 512
    $region29: #{tpu_custom_call.1} parent=1 // pred_fallthru
      _
    // Predicated region
    $region30: #{tpu_custom_call.1} parent=1 // pred_check
      _
    $region31: #{tpu_custom_call.1} parent=1 // pred_check_branch
      %65 = sbr.rel (0) target = $region33
    $region32: #{tpu_custom_call.1} parent=1 // pred_region
      %67 = dma.done [#allocation7], 2048
    $region33: #{tpu_custom_call.1} parent=1 // pred_fallthru
      _
    %p68 = scmp.eq.s32.totalorder 0, 0
    // Predicated region
    $region34: #{tpu_custom_call.1} parent=1 // pred_check
      %p69 = pneg %p68
    $region35: #{tpu_custom_call.1} parent=1 // pred_check_branch
      %71 = sbr.rel (%p69) target = $region37
    $region36: #{tpu_custom_call.1} parent=1 // pred_region
      %72 = vst [vmem:[#allocation2] sm:$0xff] 0.0
      %73 = vst [vmem:[#allocation2 + $0x8] sm:$0xff] 0.0
      %74 = vst [vmem:[#allocation2 + $0x10] sm:$0xff] 0.0
      %75 = vst [vmem:[#allocation2 + $0x18] sm:$0xff] 0.0
    $region37: #{tpu_custom_call.1} parent=1 // pred_fallthru
      _
    %v76 = vld [vmem:[#allocation3] sm:$0xff]
    %v77 = vld [vmem:[#allocation3 + $0x8] sm:$0xff]
    %v78 = vld [vmem:[#allocation3 + $0x10] sm:$0xff]
    %v79 = vld [vmem:[#allocation3 + $0x18] sm:$0xff]
    %v80 = vld [vmem:[#allocation6] sm:$0xff]
    %v81 = vld [vmem:[#allocation6 + $0x8] sm:$0xff]
    %v82 = vld [vmem:[#allocation6 + $0x10] sm:$0xff]
    %v83 = vld [vmem:[#allocation6 + $0x18] sm:$0xff]
    %v84 = vld [vmem:[%s2] sm:$0x1]
    %v86 = vperm.slane %v84, 0
    %vm88 = vcmask 261120
    %v90 = vsel %vm88, %v76, 0
    %v93 = vsel %vm88, %v77, 0
    %v96 = vsel %vm88, %v78, 0
    %v99 = vsel %vm88, %v79, 0
    %101 = vmatpush.msra.mxu0 0.0
    %102 = vmatpush.msra.mxu0 0.0
    %103 = vmatpush.msra.mxu0 0.0
    %104 = vmatpush.msra.mxu0 0.0
    %105 = vmatpush.msra.mxu0 0.0
    %106 = vmatpush.msra.mxu0 0.0
    %107 = vmatpush.msra.mxu0 0.0
    %108 = vmatpush.msra.mxu0 0.0
    %109 = vmatpush.msra.mxu0 0.0
    %110 = vmatpush.msra.mxu0 0.0
    %111 = vmatpush.msra.mxu0 0.0
    %112 = vmatpush.msra.mxu0 0.0
    %113 = vmatpush.msra.mxu0 %v83
    %114 = vmatpush.msra.mxu0 %v82
    %115 = vmatpush.msra.mxu0 %v81
    %116 = vmatpush.msra.mxu0 %v80
    %117 = vmatmul.f32.gmra.mxu0 %v90
    %v118 = vpop.f32.mrf.mxu0
    %v119 = vadd.f32 %v86, %v118
    %120 = vmatmul.f32.gmra.mxu0 %v93
    %v121 = vpop.f32.mrf.mxu0
    %v122 = vadd.f32 %v86, %v121
    %123 = vmatmul.f32.gmra.mxu0 %v96
    %v124 = vpop.f32.mrf.mxu0
    %v125 = vadd.f32 %v86, %v124
    %126 = vmatmul.f32.gmra.mxu0 %v99
    %v127 = vpop.f32.mrf.mxu0
    %v128 = vadd.f32 %v86, %v127
    %129 = vdwg.mxu0
    %v130 = vmul.f32 %v119, 0.5
    %v131 = vmul.f32 %v122, 0.5
    %v132 = vmul.f32 %v125, 0.5
    %v133 = vmul.f32 %v128, 0.5
    %v134 = vmul.f32 %v119, 0.70710677
    %v135 = vmul.f32 %v122, 0.70710677
    %v136 = vmul.f32 %v125, 0.70710677
    %v137 = vmul.f32 %v128, 0.70710677
    %v138 = vmul.f32 %v134, %v134
    %v139 = vmin.f32 16.0, %v138
    %v140 = vmul.f32 %v139, 2.1237322e-06
    %v141 = vadd.f32 %v140, 0.00028619796
    %v142 = vmul.f32 %v139, %v141
    %v143 = vadd.f32 %v142, 0.0036580483
    %v144 = vmul.f32 %v139, %v143
    %v145 = vadd.f32 %v144, 0.05243302
    %v146 = vmul.f32 %v139, %v145
    %v147 = vadd.f32 %v146, 0.18741608
    %v148 = vmul.f32 %v139, %v147
    %v149 = vadd.f32 %v148, 1.1283791
    %v150 = vmul.f32 %v134, %v149
    %v151 = vmul.f32 %v139, 3.8918573e-05
    %v152 = vadd.f32 %v151, 0.001143296
    %v153 = vmul.f32 %v139, %v152
    %v154 = vadd.f32 %v153, 0.014752088
    %v155 = vmul.f32 %v139, %v154
    %v156 = vadd.f32 %v155, 0.112945676
    %v157 = vmul.f32 %v139, %v156
    %v158 = vadd.f32 %v157, 0.4994258
    %v159 = vmul.f32 %v139, %v158
    %v160 = vadd.f32 %v159, 1.0
    %v161 = vrcp.pop %v160
    %v162 = vmul.f32 %v160, %v161
    %v163 = vsub.f32 1.0, %v162
    %v164 = vmul.f32 %v161, %v163
    %v165 = vadd.f32 %v161, %v164
    %vm166 = vweird.f32 %v160
    %vm167 = vweird.f32 %v161
    %vm168 = vmor %vm166, %vm167
    %v169 = vsel %vm168, %v161, %v165
    %v170 = vand.u32 2147483647, %v160
    %vm171 = vcmp.eq.f32.partialorder %v170, 8.507059e+37
    %v172 = vand.u32 %v160, 2147483648
    %v173 = vor.u32 1.1754944e-38, %v172
    %v174 = vsel %vm171, %v173, %v169
    %v175 = vmul.f32 %v150, %v174
    %v176 = vmin.f32 %v175, 1.0
    %v177 = vmax.f32 %v176, -1.0
    %v178 = vmul.f32 %v135, %v135
    %v179 = vmin.f32 16.0, %v178
    %v180 = vmul.f32 %v179, 2.1237322e-06
    %v181 = vadd.f32 %v180, 0.00028619796
    %v182 = vmul.f32 %v179, %v181
    %v183 = vadd.f32 %v182, 0.0036580483
    %v184 = vmul.f32 %v179, %v183
    %v185 = vadd.f32 %v184, 0.05243302
    %v186 = vmul.f32 %v179, %v185
    %v187 = vadd.f32 %v186, 0.18741608
    %v188 = vmul.f32 %v179, %v187
    %v189 = vadd.f32 %v188, 1.1283791
    %v190 = vmul.f32 %v135, %v189
    %v191 = vmul.f32 %v179, 3.8918573e-05
    %v192 = vadd.f32 %v191, 0.001143296
    %v193 = vmul.f32 %v179, %v192
    %v194 = vadd.f32 %v193, 0.014752088
    %v195 = vmul.f32 %v179, %v194
    %v196 = vadd.f32 %v195, 0.112945676
    %v197 = vmul.f32 %v179, %v196
    %v198 = vadd.f32 %v197, 0.4994258
    %v199 = vmul.f32 %v179, %v198
    %v200 = vadd.f32 %v199, 1.0
    %v201 = vrcp.pop %v200
    %v202 = vmul.f32 %v200, %v201
    %v203 = vsub.f32 1.0, %v202
    %v204 = vmul.f32 %v201, %v203
    %v205 = vadd.f32 %v201, %v204
    %vm206 = vweird.f32 %v200
    %vm207 = vweird.f32 %v201
    %vm208 = vmor %vm206, %vm207
    %v209 = vsel %vm208, %v201, %v205
    %v210 = vand.u32 2147483647, %v200
    %vm211 = vcmp.eq.f32.partialorder %v210, 8.507059e+37
    %v212 = vand.u32 %v200, 2147483648
    %v213 = vor.u32 1.1754944e-38, %v212
    %v214 = vsel %vm211, %v213, %v209
    %v215 = vmul.f32 %v190, %v214
    %v216 = vmin.f32 %v215, 1.0
    %v217 = vmax.f32 %v216, -1.0
    %v218 = vmul.f32 %v136, %v136
    %v219 = vmin.f32 16.0, %v218
    %v220 = vmul.f32 %v219, 2.1237322e-06
    %v221 = vadd.f32 %v220, 0.00028619796
    %v222 = vmul.f32 %v219, %v221
    %v223 = vadd.f32 %v222, 0.0036580483
    %v224 = vmul.f32 %v219, %v223
    %v225 = vadd.f32 %v224, 0.05243302
    %v226 = vmul.f32 %v219, %v225
    %v227 = vadd.f32 %v226, 0.18741608
    %v228 = vmul.f32 %v219, %v227
    %v229 = vadd.f32 %v228, 1.1283791
    %v230 = vmul.f32 %v136, %v229
    %v231 = vmul.f32 %v219, 3.8918573e-05
    %v232 = vadd.f32 %v231, 0.001143296
    %v233 = vmul.f32 %v219, %v232
    %v234 = vadd.f32 %v233, 0.014752088
    %v235 = vmul.f32 %v219, %v234
    %v236 = vadd.f32 %v235, 0.112945676
    %v237 = vmul.f32 %v219, %v236
    %v238 = vadd.f32 %v237, 0.4994258
    %v239 = vmul.f32 %v219, %v238
    %v240 = vadd.f32 %v239, 1.0
    %v241 = vrcp.pop %v240
    %v242 = vmul.f32 %v240, %v241
    %v243 = vsub.f32 1.0, %v242
    %v244 = vmul.f32 %v241, %v243
    %v245 = vadd.f32 %v241, %v244
    %vm246 = vweird.f32 %v240
    %vm247 = vweird.f32 %v241
    %vm248 = vmor %vm246, %vm247
    %v249 = vsel %vm248, %v241, %v245
    %v250 = vand.u32 2147483647, %v240
    %vm251 = vcmp.eq.f32.partialorder %v250, 8.507059e+37
    %v252 = vand.u32 %v240, 2147483648
    %v253 = vor.u32 1.1754944e-38, %v252
    %v254 = vsel %vm251, %v253, %v249
    %v255 = vmul.f32 %v230, %v254
    %v256 = vmin.f32 %v255, 1.0
    %v257 = vmax.f32 %v256, -1.0
    %v258 = vmul.f32 %v137, %v137
    %v259 = vmin.f32 16.0, %v258
    %v260 = vmul.f32 %v259, 2.1237322e-06
    %v261 = vadd.f32 %v260, 0.00028619796
    %v262 = vmul.f32 %v259, %v261
    %v263 = vadd.f32 %v262, 0.0036580483
    %v264 = vmul.f32 %v259, %v263
    %v265 = vadd.f32 %v264, 0.05243302
    %v266 = vmul.f32 %v259, %v265
    %v267 = vadd.f32 %v266, 0.18741608
    %v268 = vmul.f32 %v259, %v267
    %v269 = vadd.f32 %v268, 1.1283791
    %v270 = vmul.f32 %v137, %v269
    %v271 = vmul.f32 %v259, 3.8918573e-05
    %v272 = vadd.f32 %v271, 0.001143296
    %v273 = vmul.f32 %v259, %v272
    %v274 = vadd.f32 %v273, 0.014752088
    %v275 = vmul.f32 %v259, %v274
    %v276 = vadd.f32 %v275, 0.112945676
    %v277 = vmul.f32 %v259, %v276
    %v278 = vadd.f32 %v277, 0.4994258
    %v279 = vmul.f32 %v259, %v278
    %v280 = vadd.f32 %v279, 1.0
    %v281 = vrcp.pop %v280
    %v282 = vmul.f32 %v280, %v281
    %v283 = vsub.f32 1.0, %v282
    %v284 = vmul.f32 %v281, %v283
    %v285 = vadd.f32 %v281, %v284
    %vm286 = vweird.f32 %v280
    %vm287 = vweird.f32 %v281
    %vm288 = vmor %vm286, %vm287
    %v289 = vsel %vm288, %v281, %v285
    %v290 = vand.u32 2147483647, %v280
    %vm291 = vcmp.eq.f32.partialorder %v290, 8.507059e+37
    %v292 = vand.u32 %v280, 2147483648
    %v293 = vor.u32 1.1754944e-38, %v292
    %v294 = vsel %vm291, %v293, %v289
    %v295 = vmul.f32 %v270, %v294
    %v296 = vmin.f32 %v295, 1.0
    %v297 = vmax.f32 %v296, -1.0
    %v298 = vadd.f32 %v177, 1.0
    %v299 = vadd.f32 %v217, 1.0
    %v300 = vadd.f32 %v257, 1.0
    %v301 = vadd.f32 %v297, 1.0
    %v302 = vmul.f32 %v130, %v298
    %v303 = vmul.f32 %v131, %v299
    %v304 = vmul.f32 %v132, %v300
    %v305 = vmul.f32 %v133, %v301
    %v306 = vld [vmem:[#allocation2] sm:$0xff]
    %v307 = vld [vmem:[#allocation2 + $0x8] sm:$0xff]
    %v308 = vld [vmem:[#allocation2 + $0x10] sm:$0xff]
    %v309 = vld [vmem:[#allocation2 + $0x18] sm:$0xff]
    %v310 = vld [vmem:[#allocation8] sm:$0xff]
    %v311 = vld [vmem:[#allocation8 + $0x8] sm:$0xff]
    %v312 = vld [vmem:[#allocation8 + $0x10] sm:$0xff]
    %v313 = vld [vmem:[#allocation8 + $0x18] sm:$0xff]
    %v314 = vld [vmem:[#allocation8 + $0x20] sm:$0xff]
    %v315 = vld [vmem:[#allocation8 + $0x28] sm:$0xff]
    %v316 = vld [vmem:[#allocation8 + $0x30] sm:$0xff]
    %v317 = vld [vmem:[#allocation8 + $0x38] sm:$0xff]
    %v318 = vld [vmem:[#allocation8 + $0x40] sm:$0xff]
    %v319 = vld [vmem:[#allocation8 + $0x48] sm:$0xff]
    %v320 = vld [vmem:[#allocation8 + $0x50] sm:$0xff]
    %v321 = vld [vmem:[#allocation8 + $0x58] sm:$0xff]
    %v322 = vld [vmem:[#allocation8 + $0x60] sm:$0xff]
    %v323 = vld [vmem:[#allocation8 + $0x68] sm:$0xff]
    %v324 = vld [vmem:[#allocation8 + $0x70] sm:$0xff]
    %v325 = vld [vmem:[#allocation8 + $0x78] sm:$0xff]
    %326 = vmatpush.msra.mxu0 %v325
    %327 = vmatpush.msra.mxu0 %v324
    %328 = vmatpush.msra.mxu0 %v323
    %329 = vmatpush.msra.mxu0 %v322
    %330 = vmatpush.msra.mxu0 %v321
    %331 = vmatpush.msra.mxu0 %v320
    %332 = vmatpush.msra.mxu0 %v319
    %333 = vmatpush.msra.mxu0 %v318
    %334 = vmatpush.msra.mxu0 %v317
    %335 = vmatpush.msra.mxu0 %v316
    %336 = vmatpush.msra.mxu0 %v315
    %337 = vmatpush.msra.mxu0 %v314
    %338 = vmatpush.msra.mxu0 %v313
    %339 = vmatpush.msra.mxu0 %v312
    %340 = vmatpush.msra.mxu0 %v311
    %341 = vmatpush.msra.mxu0 %v310
    %342 = vmatmul.f32.gmra.mxu0 %v302
    %v343 = vpop.f32.mrf.mxu0
    %v344 = vadd.f32 0.0, %v343
    %345 = vmatmul.f32.gmra.mxu0 %v303
    %v346 = vpop.f32.mrf.mxu0
    %v347 = vadd.f32 0.0, %v346
    %348 = vmatmul.f32.gmra.mxu0 %v304
    %v349 = vpop.f32.mrf.mxu0
    %v350 = vadd.f32 0.0, %v349
    %351 = vmatmul.f32.gmra.mxu0 %v305
    %v352 = vpop.f32.mrf.mxu0
    %v353 = vadd.f32 0.0, %v352
    %354 = vdwg.mxu0
    %v355 = vadd.f32 %v306, %v344
    %v356 = vadd.f32 %v307, %v347
    %v357 = vadd.f32 %v308, %v350
    %v358 = vadd.f32 %v309, %v353
    %359 = vst [vmem:[#allocation2] sm:$0xff] %v355
    %360 = vst [vmem:[#allocation2 + $0x8] sm:$0xff] %v356
    %361 = vst [vmem:[#allocation2 + $0x10] sm:$0xff] %v357
    %362 = vst [vmem:[#allocation2 + $0x18] sm:$0xff] %v358
    // Predicated region
    $region38: #{tpu_custom_call.1} parent=1 // pred_check
      %p363 = pneg %p68
    $region39: #{tpu_custom_call.1} parent=1 // pred_check_branch
      %365 = sbr.rel (%p363) target = $region41
    $region40: #{tpu_custom_call.1} parent=1 // pred_region
      %v366 = vld [vmem:[#allocation2] sm:$0xff]
      %v367 = vld [vmem:[#allocation2 + $0x8] sm:$0xff]
      %v368 = vld [vmem:[#allocation2 + $0x10] sm:$0xff]
      %v369 = vld [vmem:[#allocation2 + $0x18] sm:$0xff]
      %v370 = vld [vmem:[%s4] sm:$0x1]
      %v372 = vperm.slane %v370, 0
      %v374 = vadd.f32 %v366, %v372
      %v375 = vadd.f32 %v367, %v372
      %v376 = vadd.f32 %v368, %v372
      %v377 = vadd.f32 %v369, %v372
      %378 = vst [vmem:[#allocation9] sm:$0xff] %v374
      %379 = vst [vmem:[#allocation9 + $0x8] sm:$0xff] %v375
      %380 = vst [vmem:[#allocation9 + $0x10] sm:$0xff] %v376
      %381 = vst [vmem:[#allocation9 + $0x18] sm:$0xff] %v377
    $region41: #{tpu_custom_call.1} parent=1 // pred_fallthru
      _
    // Predicated region
    $region42: #{tpu_custom_call.1} parent=1 // pred_check
      _
    $region43: #{tpu_custom_call.1} parent=1 // pred_check_branch
      %383 = sbr.rel (0) target = $region45
    $region44: #{tpu_custom_call.1} parent=1 // pred_region
      %385 = vsyncadd [#allocation5], 0
      %s386 = sshll.u32 [#allocation9], 4
      %s387 = int_to_ptr.vmem [resolvable:$true] %s386
      %s388 = sshll.u32 %s5, 4
      %s389 = int_to_ptr.hbm [resolvable:$true] %s388
      %394 = dma.vmem_to_hbm [thread:$0]  %s387, 512, %s389, [#allocation5], 128, 128, 8
    $region45: #{tpu_custom_call.1} parent=1 // pred_fallthru
      _
    // Predicated region
    $region46: #{tpu_custom_call.1} parent=1 // pred_check
      _
    $region47: #{tpu_custom_call.1} parent=1 // pred_check_branch
      %396 = sbr.rel (0) target = $region49
    $region48: #{tpu_custom_call.1} parent=1 // pred_region
      %398 = dma.done [#allocation5], 512
    $region49: #{tpu_custom_call.1} parent=1 // pred_fallthru
      _
    %399 = vsyncpa [#allocation4], 1
    %400 = vsyncpa [#allocation7], 1
    %401 = vsyncpa [#allocation5], 1

</llo_original>
